<compile_context>
chip_gen: v7x
topology: tpu7x:2x2x1
jax: 0.10.0
libtpu: 0.0.40
codegen_flags: <defaults>
</compile_context>

<pallas_src>
import functools
import math

import jax
import jax.numpy as jnp
from jax import lax
from jax.experimental import pallas as pl
from jax.experimental.pallas import tpu as pltpu

_SUB, _LANE = 8, 128
_GROUP = _SUB * _LANE          # 1024 elements = one (8,128) f32 vreg tile
_CHUNK_GROUPS = 8              # groups folded per fori_loop iteration


def _sq_err_kernel(x_ref, t_ref, part_ref, *, n_chunks, chunk_rows, chunk_groups):
    """Stream one (rows_per_block, 128) tile per grid step.  A fully-unrolled
    fori_loop folds (t-x)^2 chunk-by-chunk into a vreg-resident accumulator;
    the per-step fold lands directly in the VMEM-resident output block."""
    i = pl.program_id(1)

    @pl.when(i == 0)
    def _init():
        part_ref[...] = jnp.zeros_like(part_ref)

    def body(c, acc):
        r0 = pl.multiple_of(c * chunk_rows, 8)
        xs = x_ref[pl.ds(r0, chunk_rows), :].astype(jnp.float32)
        ts = t_ref[pl.ds(r0, chunk_rows), :].astype(jnp.float32)
        d = ts - xs
        return acc + d * d

    acc = lax.fori_loop(
        0, n_chunks, body,
        jnp.zeros((chunk_rows, _LANE), jnp.float32),
        unroll=True,
    )
    part_ref[...] += jnp.sum(acc.reshape(chunk_groups, _SUB, _LANE), axis=0)


def _device_kind():
    try:
        return jax.devices()[0].device_kind.lower()
    except Exception:
        return ""


def custom_loss(inputs, targets, neu_activ, _lambda):
    """Pallas implementation of the PyTorch custom_loss.forward."""
    assert inputs.shape == targets.shape

    f32 = jnp.float32
    total = math.prod(inputs.shape)          # TRUE element count (divisor)

    kind = _device_kind()
    is_v7 = "v7" in kind
    core_split = 2 if is_v7 else 1           # 2 TensorCores only on v7x
    max_bg = 1024 if is_v7 else 512          # 4 MiB / 2 MiB f32 tiles per input

    lam = jnp.asarray(_lambda, f32)
    act_sum = jnp.sum(neu_activ.astype(f32))     # tiled XLA reduce (any size)

    # ---- flatten to a lane-dense (rows, 128) view: bitcast, no HBM copy ----
    xf = jnp.ravel(inputs)
    tf = jnp.ravel(targets)
    rem = total % _LANE
    if rem:
        # TODO(synk): non-128-aligned element counts pay one pad copy; the
        # aligned (common) case is fully zero-copy.
        xf = jnp.pad(xf, (0, _LANE - rem))
        tf = jnp.pad(tf, (0, _LANE - rem))
    rows = xf.shape[0] // _LANE
    groups = rows // _SUB

    if groups == 0:
        # Degenerate (< 1024 elements): plain JAX is the right tool.
        d = tf.astype(f32) - xf.astype(f32)
        return jnp.sum(d * d) * (0.5 / float(total)) + lam * act_sum

    # ---- static tiling math (plain Python ints) ----
    core_split = min(core_split, groups)
    bg = min(max_bg, max(1, groups // core_split))
    chunk_groups = min(_CHUNK_GROUPS, bg)
    bg -= bg % chunk_groups                  # whole chunks per block
    rows_per_block = bg * _SUB
    chunk_rows = chunk_groups * _SUB
    n_chunks = bg // chunk_groups
    steps = rows // (core_split * rows_per_block)
    covered_rows = core_split * steps * rows_per_block

    x2 = xf.reshape(rows, _LANE)             # bitcast reshape (contiguous)
    t2 = tf.reshape(rows, _LANE)

    in_map = lambda c, i: (c * steps + i, 0)
    bytes_per_elem = x2.dtype.itemsize + t2.dtype.itemsize
    cost = pl.CostEstimate(
        flops=3 * covered_rows * _LANE,
        transcendentals=0,
        bytes_accessed=covered_rows * _LANE * bytes_per_elem
        + core_split * _GROUP * 4,
    )

    partials = pl.pallas_call(
        functools.partial(
            _sq_err_kernel,
            n_chunks=n_chunks,
            chunk_rows=chunk_rows,
            chunk_groups=chunk_groups,
        ),
        out_shape=jax.ShapeDtypeStruct((core_split, _SUB, _LANE), f32),
        grid_spec=pltpu.PrefetchScalarGridSpec(
            num_scalar_prefetch=0,
            grid=(core_split, steps),
            in_specs=[
                pl.BlockSpec((rows_per_block, _LANE), in_map),
                pl.BlockSpec((rows_per_block, _LANE), in_map),
            ],
            out_specs=pl.BlockSpec((None, _SUB, _LANE), lambda c, i: (c, 0, 0)),
        ),
        compiler_params=pltpu.CompilerParams(
            dimension_semantics=("parallel", "arbitrary"),
            vmem_limit_bytes=32 * 1024 * 1024,
        ),
        cost_estimate=cost,
    )(x2, t2)

    sq_sum = jnp.sum(partials)
    if covered_rows < rows:
        # Small block-unaligned remainder (< core_split blocks): reduce in XLA.
        dt = t2[covered_rows:].astype(f32) - x2[covered_rows:].astype(f32)
        sq_sum = sq_sum + jnp.sum(dt * dt)

    return sq_sum * (0.5 / float(total)) + lam * act_sum


if __name__ == "__main__":
    key = jax.random.PRNGKey(0)
    k1, k2, k3 = jax.random.split(key, 3)

    # Small shapes consistent with an autoencoder-style use of this loss.
    N, C, H, W = 2, 4, 16, 16
    HIDDEN = 32

    inputs = jax.random.normal(k1, (N, C, H, W), dtype=jnp.float32)
    targets = jax.random.normal(k2, (N, C, H, W), dtype=jnp.float32)
    neu_activ = jax.nn.sigmoid(jax.random.normal(k3, (N, HIDDEN), dtype=jnp.float32))
    lam = 0.01

    loss = jax.block_until_ready(custom_loss(inputs, targets, neu_activ, lam))

    # Pure-JAX reference check.
    ref = jnp.mean((targets - inputs) ** 2) / 2 + lam * jnp.sum(neu_activ)
    assert jnp.allclose(loss, ref, rtol=1e-5, atol=1e-6), (loss, ref)

    print("KERNEL_OK")
</pallas_src>

<mosaic_0001>
module attributes {stable_mosaic.version = 11 : i64} {
  func.func @_sq_err_kernel(%arg0: i32, %arg1: i32, %arg2: memref<16x128xf32, #tpu.memory_space<vmem>>, %arg3: memref<16x128xf32, #tpu.memory_space<vmem>>, %arg4: memref<1x8x128xf32, #tpu.memory_space<vmem>>) attributes {dimension_semantics = [#tpu.dimension_semantics<parallel>, #tpu.dimension_semantics<arbitrary>], iteration_bounds = array<i64: 1, 1>, scalar_prefetch = 0 : i64, scratch_operands = 0 : i64, tpu.core_type = #tpu.core_type<tc>, window_params = [{transform_indices = @transform_0, window_bounds = array<i64: 16, 128>}, {transform_indices = @transform_1, window_bounds = array<i64: 16, 128>}, {transform_indices = @transform_2, window_bounds = array<i64: 1, 8, 128>}]} {
    %c0_i32 = arith.constant 0 : i32
    %0 = arith.cmpi eq, %arg1, %c0_i32 : i32
    %1 = arith.extui %0 : i1 to i32
    %c0_i32_0 = arith.constant 0 : i32
    %2 = arith.cmpi ne, %1, %c0_i32_0 : i32
    scf.if %2 {
      %cst_10 = arith.constant 0.000000e+00 : f32
      %21 = vector.broadcast %cst_10 : f32 to vector<8x128xf32>
      %c0_11 = arith.constant 0 : index
      %c0_12 = arith.constant 0 : index
      %c0_13 = arith.constant 0 : index
      %22 = vector.load %arg4[%c0_11, %c0_12, %c0_13] : memref<1x8x128xf32, #tpu.memory_space<vmem>>, vector<1x8x128xf32>
      %23 = vector.shape_cast %22 : vector<1x8x128xf32> to vector<8x128xf32>
      %24 = vector.shape_cast %21 : vector<8x128xf32> to vector<1x8x128xf32>
      tpu.vector_store %arg4[%c0_11, %c0_12, %c0_13], %24 {strides = array<i32>} : memref<1x8x128xf32, #tpu.memory_space<vmem>>, vector<1x8x128xf32>,
    } else {
    }
    %cst = arith.constant 0.000000e+00 : f32
    %3 = vector.broadcast %cst : f32 to vector<16x128xf32>
    %c0_i32_1 = arith.constant 0 : i32
    %c16_i32 = arith.constant 16 : i32
    %4 = arith.muli %c0_i32_1, %c16_i32 : i32
    %5 = tpu.assume_multiple %4, 8 : i32
    %6 = arith.index_cast %5 : i32 to index
    %c0 = arith.constant 0 : index
    %7 = vector.load %arg2[%6, %c0] : memref<16x128xf32, #tpu.memory_space<vmem>>, vector<16x128xf32>
    %8 = arith.index_cast %5 : i32 to index
    %c0_2 = arith.constant 0 : index
    %9 = vector.load %arg3[%8, %c0_2] : memref<16x128xf32, #tpu.memory_space<vmem>>, vector<16x128xf32>
    %10 = arith.subf %9, %7 : vector<16x128xf32>
    %11 = arith.mulf %10, %10 : vector<16x128xf32>
    %12 = arith.addf %3, %11 : vector<16x128xf32>
    %c1_i32 = arith.constant 1 : i32
    %c0_3 = arith.constant 0 : index
    %c0_4 = arith.constant 0 : index
    %c0_5 = arith.constant 0 : index
    %13 = vector.load %arg4[%c0_3, %c0_4, %c0_5] : memref<1x8x128xf32, #tpu.memory_space<vmem>>, vector<1x8x128xf32>
    %14 = vector.shape_cast %13 : vector<1x8x128xf32> to vector<8x128xf32>
    %15 = vector.shape_cast %12 : vector<16x128xf32> to vector<2x8x128xf32>
    %cst_6 = arith.constant dense<0.000000e+00> : vector<8x128xf32>
    %16 = vector.multi_reduction <add>, %15, %cst_6 [0] : vector<2x8x128xf32> to vector<8x128xf32>
    %17 = arith.addf %14, %16 : vector<8x128xf32>
    %c0_7 = arith.constant 0 : index
    %c0_8 = arith.constant 0 : index
    %c0_9 = arith.constant 0 : index
    %18 = vector.load %arg4[%c0_7, %c0_8, %c0_9] : memref<1x8x128xf32, #tpu.memory_space<vmem>>, vector<1x8x128xf32>
    %19 = vector.shape_cast %18 : vector<1x8x128xf32> to vector<8x128xf32>
    %20 = vector.shape_cast %17 : vector<8x128xf32> to vector<1x8x128xf32>
    tpu.vector_store %arg4[%c0_7, %c0_8, %c0_9], %20 {strides = array<i32>} : memref<1x8x128xf32, #tpu.memory_space<vmem>>, vector<1x8x128xf32>,
    return
  }
  func.func @transform_0(%arg0: i32, %arg1: i32) -> (i32, i32) {
    %c1_i32 = arith.constant 1 : i32
    %0 = arith.muli %arg0, %c1_i32 : i32
    %1 = arith.addi %0, %arg1 : i32
    %c0_i32 = arith.constant 0 : i32
    %c0_i32_0 = arith.constant 0 : i32
    return %1, %c0_i32 : i32, i32
  }
  func.func @transform_1(%arg0: i32, %arg1: i32) -> (i32, i32) {
    %c1_i32 = arith.constant 1 : i32
    %0 = arith.muli %arg0, %c1_i32 : i32
    %1 = arith.addi %0, %arg1 : i32
    %c0_i32 = arith.constant 0 : i32
    %c0_i32_0 = arith.constant 0 : i32
    return %1, %c0_i32 : i32, i32
  }
  func.func @transform_2(%arg0: i32, %arg1: i32) -> (i32, i32, i32) {
    %c0_i32 = arith.constant 0 : i32
    %c0_i32_0 = arith.constant 0 : i32
    %c0_i32_1 = arith.constant 0 : i32
    return %arg0, %c0_i32, %c0_i32_0 : i32, i32, i32
  }
}

</mosaic_0001>

<llo_original>
// kernel: tpu_custom_call.1
$region0: #{tpu_custom_call.1}
  #allocation0 [shape = 'u32[]', space=smem, size = 0x4, offset = 0x4, fixed_abs, tag = 'smem constant byte address 0x4 - core index']
  #allocation1 [shape = 'u32[144,128]{1,0:T(1,128)}', space=vmem, size = 0x12000, scoped, tag = 'internal scratch']
  %s0 = inlined_call_operand.hbm [shape: f32[16,128], index: 0, kind: input, shape index: {}]
  %s1 = inlined_call_operand.hbm [shape: f32[16,128], index: 1, kind: input, shape index: {}]
  %s2 = inlined_call_operand.hbm [shape: f32[1,8,128], index: 2, kind: output, shape index: {}]
  %s3 = sld [smem:[#allocation0]]
  $region30: #{tpu_custom_call.1} parent=0
    _
  %s5 = ssub.s32 1, %s3
  %s6 = scalar_select 0, %s5, %s3
  $region1: #{tpu_custom_call.1} parent=0
    #allocation2 [shape = 'u8[8192]{0}', space=vmem, size = 0x2000, scoped, tag = 'input window, operand 0, single buffered']
    #allocation3 [shape = 's32[1]{0}', space=sflag, size = 0x4, scoped, tag = 'scoped memory for tpu_custom_call.1']
    #allocation4 [shape = 's32[1]{0}', space=sflag, size = 0x4, scoped, tag = 'scoped memory for tpu_custom_call.1']
    #allocation5 [shape = 'u8[8192]{0}', space=vmem, size = 0x2000, scoped, tag = 'input window, operand 1, single buffered']
    #allocation6 [shape = 's32[1]{0}', space=sflag, size = 0x4, scoped, tag = 'scoped memory for tpu_custom_call.1']
    #allocation7 [shape = 'u8[4096]{0}', space=vmem, size = 0x1000, scoped, tag = 'output window, operand 0, single buffered']
    %7 = vsyncpa [#allocation3], 0
    %8 = vsyncpa [#allocation6], 0
    %9 = vsyncpa [#allocation4], 0
    // Predicated region
    $region2: #{tpu_custom_call.1} parent=1 // pred_check
      _
    $region3: #{tpu_custom_call.1} parent=1 // pred_check_branch
      %11 = sbr.rel (0) target = $region5
    $region4: #{tpu_custom_call.1} parent=1 // pred_region
      %s12 = sadd.s32 0, 0
      %s13 = smul.u32 2, %s12
      %s15 = ssub.s32 256, 256
      %16 = vsyncadd [#allocation3], %s15
      %s17 = smul.addr %s13, 128
      %s18 = scalar_lea.hbm %s0, %s17
      %s19 = sshll.u32 [#allocation2], 4
      %s20 = int_to_ptr.vmem [resolvable:$true] %s19
      %25 = dma.hbm_to_vmem [thread:$0]  %s18, 256, %s20, [#allocation3], 128, 128, 8
    $region5: #{tpu_custom_call.1} parent=1 // pred_fallthru
      _
    // Predicated region
    $region6: #{tpu_custom_call.1} parent=1 // pred_check
      _
    $region7: #{tpu_custom_call.1} parent=1 // pred_check_branch
      %27 = sbr.rel (0) target = $region9
    $region8: #{tpu_custom_call.1} parent=1 // pred_region
      %s28 = sadd.s32 0, 0
      %s29 = smul.u32 2, %s28
      %s31 = ssub.s32 256, 256
      %32 = vsyncadd [#allocation6], %s31
      %s33 = smul.addr %s29, 128
      %s34 = scalar_lea.hbm %s1, %s33
      %s35 = sshll.u32 [#allocation5], 4
      %s36 = int_to_ptr.vmem [resolvable:$true] %s35
      %41 = dma.hbm_to_vmem [thread:$0]  %s34, 256, %s36, [#allocation6], 128, 128, 8
    $region9: #{tpu_custom_call.1} parent=1 // pred_fallthru
      _
    // Predicated region
    $region10: #{tpu_custom_call.1} parent=1 // pred_check
      _
    $region11: #{tpu_custom_call.1} parent=1 // pred_check_branch
      %43 = sbr.rel (0) target = $region13
    $region12: #{tpu_custom_call.1} parent=1 // pred_region
      %44 = dma.done [#allocation3], 256
    $region13: #{tpu_custom_call.1} parent=1 // pred_fallthru
      _
    // Predicated region
    $region14: #{tpu_custom_call.1} parent=1 // pred_check
      _
    $region15: #{tpu_custom_call.1} parent=1 // pred_check_branch
      %46 = sbr.rel (0) target = $region17
    $region16: #{tpu_custom_call.1} parent=1 // pred_region
      %47 = dma.done [#allocation6], 256
    $region17: #{tpu_custom_call.1} parent=1 // pred_fallthru
      _
    %s48 = sadd.s32 0, 0
    %s49 = smul.u32 2, %s48
    %s50 = sadd.s32 0, 0
    %s51 = smul.u32 2, %s50
    %p52 = scmp.eq.s32.totalorder 0, 0
    // Predicated region
    $region18: #{tpu_custom_call.1} parent=1 // pred_check
      %p53 = pneg %p52
    $region19: #{tpu_custom_call.1} parent=1 // pred_check_branch
      %55 = sbr.rel (%p53) target = $region21
    $region20: #{tpu_custom_call.1} parent=1 // pred_region
      %56 = vst [vmem:[#allocation7] sm:$0xff] 0.0
    $region21: #{tpu_custom_call.1} parent=1 // pred_fallthru
      _
    %v57 = vld [vmem:[#allocation2] sm:$0xff]
    %v58 = vld [vmem:[#allocation2 + $0x8] sm:$0xff]
    %v59 = vld [vmem:[#allocation5] sm:$0xff]
    %v60 = vld [vmem:[#allocation5 + $0x8] sm:$0xff]
    %v61 = vsub.f32 %v59, %v57
    %v62 = vsub.f32 %v60, %v58
    %v63 = vmul.f32 %v61, %v61
    %v64 = vmul.f32 %v62, %v62
    %v65 = vadd.f32 %v63, 0.0
    %v66 = vadd.f32 %v64, 0.0
    %v67 = vld [vmem:[#allocation7] sm:$0xff]
    %v68 = vadd.f32 %v65, %v66
    %v69 = vadd.f32 %v67, %v68
    %70 = vst [vmem:[#allocation7] sm:$0xff] %v69
    // Predicated region
    $region22: #{tpu_custom_call.1} parent=1 // pred_check
      _
    $region23: #{tpu_custom_call.1} parent=1 // pred_check_branch
      %72 = sbr.rel (0) target = $region25
    $region24: #{tpu_custom_call.1} parent=1 // pred_region
      %s74 = ssub.s32 128, 128
      %75 = vsyncadd [#allocation4], %s74
      %s77 = sshll.u32 [#allocation7], 4
      %s78 = int_to_ptr.vmem [resolvable:$true] %s77
      %80 = dma.vmem_to_hbm [thread:$0]  %s78, 128, %s2, [#allocation4]
    $region25: #{tpu_custom_call.1} parent=1 // pred_fallthru
      _
    // Predicated region
    $region26: #{tpu_custom_call.1} parent=1 // pred_check
      _
    $region27: #{tpu_custom_call.1} parent=1 // pred_check_branch
      %82 = sbr.rel (0) target = $region29
    $region28: #{tpu_custom_call.1} parent=1 // pred_region
      %83 = dma.done [#allocation4], 128
    $region29: #{tpu_custom_call.1} parent=1 // pred_fallthru
      _
    %84 = vsyncpa [#allocation3], 1
    %85 = vsyncpa [#allocation6], 1
    %86 = vsyncpa [#allocation4], 1

</llo_original>
